<compile_context>
chip_gen: v7x
topology: tpu7x:2x2x1
jax: 0.10.0
libtpu: 0.0.40
codegen_flags: <defaults>
</compile_context>

<pallas_src>
import functools
import math

import jax
import jax.numpy as jnp
from jax import lax
from jax.experimental import pallas as pl
from jax.experimental.pallas import tpu as pltpu


def _pick_tile(dim, preferred, align):
    """Largest tile <= `preferred` that divides `dim` and is a multiple of
    `align`; falls back to the full dim (always a legal block size)."""
    if dim <= preferred:
        return dim
    t = (preferred // align) * align
    while t >= align:
        if dim % t == 0:
            return t
        t -= align
    return dim


# --------------------------- tiled linear: y = x @ w + b ---------------------------

def _linear_kernel(x_ref, w_ref, b_ref, o_ref):
    # x_ref: (TM, K), w_ref: (K, TN), b_ref: (1, TN), o_ref: (TM, TN)
    acc = jnp.dot(x_ref[...], w_ref[...], preferred_element_type=jnp.float32)
    o_ref[...] = (acc + b_ref[...].astype(jnp.float32)).astype(o_ref.dtype)


def _linear(x2, w, b, *, tm_pref=256, tn_pref=512):
    M, K = x2.shape
    N = w.shape[1]
    tm = _pick_tile(M, tm_pref, 8)
    tn = _pick_tile(N, tn_pref, 128)
    grid = (M // tm, N // tn)
    return pl.pallas_call(
        _linear_kernel,
        out_shape=jax.ShapeDtypeStruct((M, N), x2.dtype),
        grid_spec=pltpu.PrefetchScalarGridSpec(
            num_scalar_prefetch=0,
            grid=grid,
            in_specs=[
                pl.BlockSpec((tm, K), lambda i, j: (i, 0)),
                pl.BlockSpec((K, tn), lambda i, j: (0, j)),
                pl.BlockSpec((1, tn), lambda i, j: (0, j)),
            ],
            out_specs=pl.BlockSpec((tm, tn), lambda i, j: (i, j)),
        ),
        compiler_params=pltpu.CompilerParams(
            dimension_semantics=("parallel", "parallel")),
    )(x2, w, b.reshape(1, N))


# --------------------- flash-style multi-head attention core -----------------------

def _mha_kernel(*refs, scale, has_mask):
    if has_mask:
        q_ref, k_ref, v_ref, mask_ref, o_ref, m_sc, l_sc, acc_sc = refs
    else:
        q_ref, k_ref, v_ref, o_ref, m_sc, l_sc, acc_sc = refs
        mask_ref = None

    kv = pl.program_id(2)

    @pl.when(kv == 0)
    def _():
        m_sc[...] = jnp.full_like(m_sc, -jnp.inf)
        l_sc[...] = jnp.zeros_like(l_sc)
        acc_sc[...] = jnp.zeros_like(acc_sc)

    q = q_ref[...]                                           # (TQ, D)
    k = k_ref[...]                                           # (TK, D)
    s = lax.dot_general(q, k, dimension_numbers=(((1,), (1,)), ((), ())),
                        preferred_element_type=jnp.float32) * scale   # (TQ, TK)
    if mask_ref is not None:
        s = jnp.where(mask_ref[...] == 0, jnp.float32(-1e9), s)

    m_prev = m_sc[...]                                       # (TQ, 1)
    m_new = jnp.maximum(m_prev, s.max(axis=-1, keepdims=True))
    alpha = jnp.exp(m_prev - m_new)
    p = jnp.exp(s - m_new)                                   # (TQ, TK)
    l_sc[...] = alpha * l_sc[...] + p.sum(axis=-1, keepdims=True)
    acc_sc[...] = alpha * acc_sc[...] + jnp.dot(
        p.astype(v_ref.dtype), v_ref[...], preferred_element_type=jnp.float32)
    m_sc[...] = m_new

    @pl.when(kv == pl.num_programs(2) - 1)
    def _():
        o_ref[...] = (acc_sc[...] / l_sc[...]).astype(o_ref.dtype)


def _attention(q, k, v, mask, num_heads, *, tq_pref=128, tk_pref=128):
    # q, k, v: (B*NH, S, D); mask: (B, S, S) or None
    BH, S, D = q.shape
    tq = _pick_tile(S, tq_pref, 8)
    tk = _pick_tile(S, tk_pref, 128)   # 128-aligned so the mask block stays lane-legal
    grid = (BH, S // tq, S // tk)
    scale = 1.0 / math.sqrt(D)
    has_mask = mask is not None
    nh = num_heads

    in_specs = [
        pl.BlockSpec((None, tq, D), lambda bh, qi, kv: (bh, qi, 0)),
        pl.BlockSpec((None, tk, D), lambda bh, qi, kv: (bh, kv, 0)),
        pl.BlockSpec((None, tk, D), lambda bh, qi, kv: (bh, kv, 0)),
    ]
    inputs = [q, k, v]
    if has_mask:
        in_specs.append(
            pl.BlockSpec((None, tq, tk), lambda bh, qi, kv: (bh // nh, qi, kv)))
        inputs.append(mask)

    kernel = functools.partial(_mha_kernel, scale=scale, has_mask=has_mask)
    return pl.pallas_call(
        kernel,
        out_shape=jax.ShapeDtypeStruct((BH, S, D), q.dtype),
        grid_spec=pltpu.PrefetchScalarGridSpec(
            num_scalar_prefetch=0,
            grid=grid,
            in_specs=in_specs,
            out_specs=pl.BlockSpec((None, tq, D), lambda bh, qi, kv: (bh, qi, 0)),
            scratch_shapes=[
                pltpu.VMEM((tq, 1), jnp.float32),   # running max m
                pltpu.VMEM((tq, 1), jnp.float32),   # running denom l
                pltpu.VMEM((tq, D), jnp.float32),   # output accumulator
            ],
        ),
        compiler_params=pltpu.CompilerParams(
            dimension_semantics=("parallel", "parallel", "arbitrary")),
    )(*inputs)


# -------------------------------- module forward ------------------------------------

def fast_multi_head_attention(x, w_qkv, b_qkv, w_out, b_out, num_heads,
                              attention_mask=None):
    """Forward of FastMultiHeadAttention (eval mode).

    x:      (B, S, H)
    w_qkv:  (H, 3H)   (PyTorch nn.Linear weight, pre-transposed)   b_qkv: (3H,)
    w_out:  (H, H)                                                  b_out: (H,)
    attention_mask: optional (B, S, S); positions where mask == 0 get score -1e9,
                    shared across heads.
    Returns (output, None).
    """
    B, S, H = x.shape
    NH = num_heads
    D = H // NH
    M = B * S

    x2 = x.reshape(M, H)
    qkv = _linear(x2, w_qkv, b_qkv)                                   # (M, 3H)
    qkv = qkv.reshape(B, S, 3, NH, D).transpose(2, 0, 3, 1, 4)        # (3, B, NH, S, D)
    q = qkv[0].reshape(B * NH, S, D)
    k = qkv[1].reshape(B * NH, S, D)
    v = qkv[2].reshape(B * NH, S, D)

    ctx = _attention(q, k, v, attention_mask, NH)                     # (B*NH, S, D)
    ctx = ctx.reshape(B, NH, S, D).transpose(0, 2, 1, 3).reshape(M, H)

    out = _linear(ctx, w_out, b_out)                                  # (M, H)
    # TODO(synk): attn_dropout / output_dropout are identity in eval mode; training-mode
    #             dropout (stateful PRNG mask) intentionally omitted.
    # TODO(synk): output_attentions=True would require materializing the full softmax
    #             probabilities, which this flash-style kernel deliberately avoids.
    return out.reshape(B, S, H), None


# ---------------------------------- reference ----------------------------------------

def _reference(x, w_qkv, b_qkv, w_out, b_out, num_heads, mask):
    B, S, H = x.shape
    D = H // num_heads
    qkv = jnp.einsum("bsh,hk->bsk", x, w_qkv) + b_qkv
    q, k, v = jnp.split(qkv, 3, axis=-1)

    def split_heads(t):
        return t.reshape(B, S, num_heads, D).transpose(0, 2, 1, 3)

    q, k, v = split_heads(q), split_heads(k), split_heads(v)
    scores = jnp.einsum("bhqd,bhkd->bhqk", q, k) / math.sqrt(D)
    if mask is not None:
        scores = jnp.where(mask[:, None, :, :] == 0, -1e9, scores)
    probs = jax.nn.softmax(scores, axis=-1)
    ctx = jnp.einsum("bhqk,bhkd->bhqd", probs, v)
    ctx = ctx.transpose(0, 2, 1, 3).reshape(B, S, H)
    return jnp.einsum("bsh,ho->bso", ctx, w_out) + b_out


if __name__ == "__main__":
    # Small deterministic shapes: batch=2, seq=8, hidden=32, heads=4 (head_dim=8)
    B, S, H, NH = 2, 8, 32, 4
    key = jax.random.PRNGKey(0)
    kx, k1, k2, k3, k4 = jax.random.split(key, 5)

    x = jax.random.normal(kx, (B, S, H), dtype=jnp.float32)
    bound = 1.0 / math.sqrt(H)
    w_qkv = jax.random.uniform(k1, (H, 3 * H), jnp.float32, -bound, bound)
    b_qkv = jax.random.uniform(k2, (3 * H,), jnp.float32, -bound, bound)
    w_out = jax.random.uniform(k3, (H, H), jnp.float32, -bound, bound)
    b_out = jax.random.uniform(k4, (H,), jnp.float32, -bound, bound)

    # (B, S, S) mask: 1 = attend, 0 = masked (score set to -1e9), shared across heads.
    mask = jnp.broadcast_to(jnp.tril(jnp.ones((S, S), dtype=jnp.int32)), (B, S, S))

    out, probs = fast_multi_head_attention(x, w_qkv, b_qkv, w_out, b_out, NH,
                                           attention_mask=mask)
    out = jax.block_until_ready(out)

    ref = _reference(x, w_qkv, b_qkv, w_out, b_out, NH, mask)
    assert out.shape == (B, S, H)
    assert probs is None
    assert jnp.allclose(out, ref, atol=2e-5, rtol=2e-5), \
        float(jnp.max(jnp.abs(out - ref)))

    # Also exercise the no-mask path once.
    out_nm, _ = fast_multi_head_attention(x, w_qkv, b_qkv, w_out, b_out, NH)
    out_nm = jax.block_until_ready(out_nm)
    ref_nm = _reference(x, w_qkv, b_qkv, w_out, b_out, NH, None)
    assert jnp.allclose(out_nm, ref_nm, atol=2e-5, rtol=2e-5)

    print("KERNEL_OK")
</pallas_src>

<mosaic_0001>
module attributes {stable_mosaic.version = 11 : i64} {
  func.func @_linear_kernel(%arg0: i32, %arg1: i32, %arg2: memref<16x32xf32, #tpu.memory_space<vmem>>, %arg3: memref<32x96xf32, #tpu.memory_space<vmem>>, %arg4: memref<1x96xf32, #tpu.memory_space<vmem>>, %arg5: memref<16x96xf32, #tpu.memory_space<vmem>>) attributes {dimension_semantics = [#tpu.dimension_semantics<parallel>, #tpu.dimension_semantics<parallel>], iteration_bounds = array<i64: 1, 1>, scalar_prefetch = 0 : i64, scratch_operands = 0 : i64, tpu.core_type = #tpu.core_type<tc>, window_params = [{transform_indices = @transform_0, window_bounds = array<i64: 16, 32>}, {transform_indices = @transform_1, window_bounds = array<i64: 32, 96>}, {transform_indices = @transform_2, window_bounds = array<i64: 1, 96>}, {transform_indices = @transform_3, window_bounds = array<i64: 16, 96>}]} {
    %c0 = arith.constant 0 : index
    %c0_0 = arith.constant 0 : index
    %0 = vector.load %arg2[%c0, %c0_0] : memref<16x32xf32, #tpu.memory_space<vmem>>, vector<16x32xf32>
    %c0_1 = arith.constant 0 : index
    %c0_2 = arith.constant 0 : index
    %1 = vector.load %arg3[%c0_1, %c0_2] : memref<32x96xf32, #tpu.memory_space<vmem>>, vector<32x96xf32>
    %cst = arith.constant dense<0.000000e+00> : vector<16x96xf32>
    %2 = tpu.matmul %0, %1, %cst {dimension_numbers = #tpu.dot_dimension_numbers<[1], [0], [0], [1], [0, 0, 1, 1], [], []>} : vector<16x32xf32>, vector<32x96xf32>, vector<16x96xf32> -> vector<16x96xf32>
    %c0_3 = arith.constant 0 : index
    %c0_4 = arith.constant 0 : index
    %3 = vector.load %arg4[%c0_3, %c0_4] : memref<1x96xf32, #tpu.memory_space<vmem>>, vector<1x96xf32>
    %4 = vector.broadcast %3 : vector<1x96xf32> to vector<16x96xf32>
    %5 = arith.addf %2, %4 : vector<16x96xf32>
    %c0_5 = arith.constant 0 : index
    %c0_6 = arith.constant 0 : index
    %6 = vector.load %arg5[%c0_5, %c0_6] : memref<16x96xf32, #tpu.memory_space<vmem>>, vector<16x96xf32>
    tpu.vector_store %arg5[%c0_5, %c0_6], %5 {strides = array<i32>} : memref<16x96xf32, #tpu.memory_space<vmem>>, vector<16x96xf32>,
    return
  }
  func.func @transform_0(%arg0: i32, %arg1: i32) -> (i32, i32) {
    %c0_i32 = arith.constant 0 : i32
    %c0_i32_0 = arith.constant 0 : i32
    return %arg0, %c0_i32 : i32, i32
  }
  func.func @transform_1(%arg0: i32, %arg1: i32) -> (i32, i32) {
    %c0_i32 = arith.constant 0 : i32
    %c0_i32_0 = arith.constant 0 : i32
    return %c0_i32, %arg1 : i32, i32
  }
  func.func @transform_2(%arg0: i32, %arg1: i32) -> (i32, i32) {
    %c0_i32 = arith.constant 0 : i32
    %c0_i32_0 = arith.constant 0 : i32
    return %c0_i32, %arg1 : i32, i32
  }
  func.func @transform_3(%arg0: i32, %arg1: i32) -> (i32, i32) {
    %c0_i32 = arith.constant 0 : i32
    return %arg0, %arg1 : i32, i32
  }
}

</mosaic_0001>

<llo_original>
// kernel: tpu_custom_call.1
$region0: #{tpu_custom_call.1}
  #allocation0 [shape = 'u32[]', space=smem, size = 0x4, offset = 0x4, fixed_abs, tag = 'smem constant byte address 0x4 - core index']
  #allocation1 [shape = 'u32[144,128]{1,0:T(1,128)}', space=vmem, size = 0x12000, scoped, tag = 'internal scratch']
  %s0 = inlined_call_operand.hbm [shape: f32[16,32], index: 0, kind: input, shape index: {}]
  %s1 = inlined_call_operand.hbm [shape: f32[32,96], index: 1, kind: input, shape index: {}]
  %s2 = inlined_call_operand.vmem [shape: f32[1,96], index: 2, kind: input, shape index: {}]
  %s3 = inlined_call_operand.hbm [shape: f32[16,96], index: 3, kind: output, shape index: {}]
  %s4 = sld [smem:[#allocation0]]
  $region30: #{tpu_custom_call.1} parent=0
    _
  %s6 = ssub.s32 1, %s4
  %s7 = scalar_select 0, %s6, %s4
  $region1: #{tpu_custom_call.1} parent=0
    #allocation2 [shape = 'u8[8192]{0}', space=vmem, size = 0x2000, scoped, tag = 'input window, operand 0, single buffered']
    #allocation3 [shape = 's32[1]{0}', space=sflag, size = 0x4, scoped, tag = 'scoped memory for tpu_custom_call.1']
    #allocation4 [shape = 's32[1]{0}', space=sflag, size = 0x4, scoped, tag = 'scoped memory for tpu_custom_call.1']
    #allocation5 [shape = 'u8[16384]{0}', space=vmem, size = 0x4000, scoped, tag = 'input window, operand 1, single buffered']
    #allocation6 [shape = 's32[1]{0}', space=sflag, size = 0x4, scoped, tag = 'scoped memory for tpu_custom_call.1']
    #allocation7 [shape = 'u8[8192]{0}', space=vmem, size = 0x2000, scoped, tag = 'output window, operand 0, single buffered']
    %8 = vsyncpa [#allocation3], 0
    %9 = vsyncpa [#allocation6], 0
    %10 = vsyncpa [#allocation4], 0
    // Predicated region
    $region2: #{tpu_custom_call.1} parent=1 // pred_check
      _
    $region3: #{tpu_custom_call.1} parent=1 // pred_check_branch
      %12 = sbr.rel (0) target = $region5
    $region4: #{tpu_custom_call.1} parent=1 // pred_region
      %s14 = ssub.s32 256, 256
      %15 = vsyncadd [#allocation3], %s14
      %s16 = sshll.u32 [#allocation2], 4
      %s17 = int_to_ptr.vmem [resolvable:$true] %s16
      %22 = dma.hbm_to_vmem [thread:$0]  %s0, 256, %s17, [#allocation3], 128, 128, 8
    $region5: #{tpu_custom_call.1} parent=1 // pred_fallthru
      _
    // Predicated region
    $region6: #{tpu_custom_call.1} parent=1 // pred_check
      _
    $region7: #{tpu_custom_call.1} parent=1 // pred_check_branch
      %24 = sbr.rel (0) target = $region9
    $region8: #{tpu_custom_call.1} parent=1 // pred_region
      %s26 = ssub.s32 512, 512
      %27 = vsyncadd [#allocation6], %s26
      %s28 = sshll.u32 [#allocation5], 4
      %s29 = int_to_ptr.vmem [resolvable:$true] %s28
      %34 = dma.hbm_to_vmem [thread:$0]  %s1, 512, %s29, [#allocation6], 128, 128, 8
    $region9: #{tpu_custom_call.1} parent=1 // pred_fallthru
      _
    // Predicated region
    $region10: #{tpu_custom_call.1} parent=1 // pred_check
      _
    $region11: #{tpu_custom_call.1} parent=1 // pred_check_branch
      %36 = sbr.rel (0) target = $region13
    $region12: #{tpu_custom_call.1} parent=1 // pred_region
      _
    $region13: #{tpu_custom_call.1} parent=1 // pred_fallthru
      _
    // Predicated region
    $region14: #{tpu_custom_call.1} parent=1 // pred_check
      _
    $region15: #{tpu_custom_call.1} parent=1 // pred_check_branch
      %38 = sbr.rel (0) target = $region17
    $region16: #{tpu_custom_call.1} parent=1 // pred_region
      %39 = dma.done [#allocation3], 256
    $region17: #{tpu_custom_call.1} parent=1 // pred_fallthru
      _
    // Predicated region
    $region18: #{tpu_custom_call.1} parent=1 // pred_check
      _
    $region19: #{tpu_custom_call.1} parent=1 // pred_check_branch
      %41 = sbr.rel (0) target = $region21
    $region20: #{tpu_custom_call.1} parent=1 // pred_region
      %42 = dma.done [#allocation6], 512
    $region21: #{tpu_custom_call.1} parent=1 // pred_fallthru
      _
    %v43 = vld [vmem:[#allocation2] sm:$0xff]
    %v44 = vld [vmem:[#allocation2 + $0x8] sm:$0xff]
    %v45 = vld [vmem:[#allocation5] sm:$0xff]
    %v46 = vld [vmem:[#allocation5 + $0x8] sm:$0xff]
    %v47 = vld [vmem:[#allocation5 + $0x10] sm:$0xff]
    %v48 = vld [vmem:[#allocation5 + $0x18] sm:$0xff]
    %v49 = vld [vmem:[%s2] sm:$0x1]
    %v51 = vlaneseq
    %v52 = vshrl.u32 %v51, 7
    %v53 = vsub.s32 0, %v52
    %v54 = vrot.slane %v49, %v53
    %vm56 = vcmask 261120
    %v58 = vsel %vm56, %v43, 0
    %v61 = vsel %vm56, %v44, 0
    %63 = vmatprep.subr.mxu0 0.0
    %64 = vmatpush1.msra.mxu0 %v45
    %65 = vmatprep.subr.mxu0 0.0
    %66 = vmatpush1.msra.mxu0 %v46
    %67 = vmatprep.subr.mxu0 0.0
    %68 = vmatpush1.msra.mxu0 %v47
    %69 = vmatprep.subr.mxu0 0.0
    %70 = vmatpush1.msra.mxu0 %v48
    %71 = vmatprep.subr.mxu0 0.0
    %72 = vmatpush1.msra.mxu0 0.0
    %73 = vmatprep.subr.mxu0 0.0
    %74 = vmatpush1.msra.mxu0 0.0
    %75 = vmatprep.subr.mxu0 0.0
    %76 = vmatpush1.msra.mxu0 0.0
    %77 = vmatprep.subr.mxu0 0.0
    %78 = vmatpush1.msra.mxu0 0.0
    %79 = vmatprep.subr.mxu0 0.0
    %80 = vmatpush1.msra.mxu0 0.0
    %81 = vmatprep.subr.mxu0 0.0
    %82 = vmatpush1.msra.mxu0 0.0
    %83 = vmatprep.subr.mxu0 0.0
    %84 = vmatpush1.msra.mxu0 0.0
    %85 = vmatprep.subr.mxu0 0.0
    %86 = vmatpush1.msra.mxu0 0.0
    %87 = vmatprep.subr.mxu0 0.0
    %88 = vmatpush1.msra.mxu0 0.0
    %89 = vmatprep.subr.mxu0 0.0
    %90 = vmatpush1.msra.mxu0 0.0
    %91 = vmatprep.subr.mxu0 0.0
    %92 = vmatpush1.msra.mxu0 0.0
    %93 = vmatprep.subr.mxu0 0.0
    %94 = vmatpush1.msra.mxu0 0.0
    %95 = vmatprep.subr.mxu0 0.0
    %96 = vmatpush1.msra.mxu0 0.0
    %97 = vmatprep.subr.mxu0 0.0
    %98 = vmatpush1.msra.mxu0 0.0
    %99 = vmatprep.subr.mxu0 0.0
    %100 = vmatpush1.msra.mxu0 0.0
    %101 = vmatprep.subr.mxu0 0.0
    %102 = vmatpush1.msra.mxu0 0.0
    %103 = vmatprep.subr.mxu0 0.0
    %104 = vmatpush1.msra.mxu0 0.0
    %105 = vmatprep.subr.mxu0 0.0
    %106 = vmatpush1.msra.mxu0 0.0
    %107 = vmatprep.subr.mxu0 0.0
    %108 = vmatpush1.msra.mxu0 0.0
    %109 = vmatprep.subr.mxu0 0.0
    %110 = vmatpush1.msra.mxu0 0.0
    %111 = vmatprep.subr.mxu0 0.0
    %112 = vmatpush1.msra.mxu0 0.0
    %113 = vmatprep.subr.mxu0 0.0
    %114 = vmatpush1.msra.mxu0 0.0
    %115 = vmatprep.subr.mxu0 0.0
    %116 = vmatpush1.msra.mxu0 0.0
    %117 = vmatprep.subr.mxu0 0.0
    %118 = vmatpush1.msra.mxu0 0.0
    %119 = vmatprep.subr.mxu0 0.0
    %120 = vmatpush1.msra.mxu0 0.0
    %121 = vmatprep.subr.mxu0 0.0
    %122 = vmatpush1.msra.mxu0 0.0
    %123 = vmatprep.subr.mxu0 0.0
    %124 = vmatpush1.msra.mxu0 0.0
    %125 = vmatprep.subr.mxu0 0.0
    %126 = vmatpush1.msra.mxu0 0.0
    %127 = vmatprep.mubr.f32.mxu0 0.0
    %128 = vmatmul.mubr.f32.gmra.mrb[0].mxu0 %v58
    %v129 = vpop.f32.mrb[0].mxu0
    %v130 = vadd.f32 %v54, %v129
    %v131 = vpop.f32.mrb[0].mxu0
    %132 = vmatprep.mubr.f32.mxu0 0.0
    %133 = vmatmul.mubr.f32.gmra.mrb[0].mxu0 %v61
    %v134 = vpop.f32.mrb[0].mxu0
    %v135 = vadd.f32 %v54, %v134
    %v136 = vpop.f32.mrb[0].mxu0
    %137 = vdwg.mxu0
    %vm138 = vcmask 785408
    %139 = vst.msk [vmem:[#allocation7] sm:$0xff] %vm138, %v130
    %140 = vst.msk [vmem:[#allocation7 + $0x8] sm:$0xff] %vm138, %v135
    // Predicated region
    $region22: #{tpu_custom_call.1} parent=1 // pred_check
      _
    $region23: #{tpu_custom_call.1} parent=1 // pred_check_branch
      %142 = sbr.rel (0) target = $region25
    $region24: #{tpu_custom_call.1} parent=1 // pred_region
      %s144 = ssub.s32 256, 256
      %145 = vsyncadd [#allocation4], %s144
      %s146 = sshll.u32 [#allocation7], 4
      %s147 = int_to_ptr.vmem [resolvable:$true] %s146
      %152 = dma.vmem_to_hbm [thread:$0]  %s147, 256, %s3, [#allocation4], 128, 128, 8
    $region25: #{tpu_custom_call.1} parent=1 // pred_fallthru
      _
    // Predicated region
    $region26: #{tpu_custom_call.1} parent=1 // pred_check
      _
    $region27: #{tpu_custom_call.1} parent=1 // pred_check_branch
      %154 = sbr.rel (0) target = $region29
    $region28: #{tpu_custom_call.1} parent=1 // pred_region
      %155 = dma.done [#allocation4], 256
    $region29: #{tpu_custom_call.1} parent=1 // pred_fallthru
      _
    %156 = vsyncpa [#allocation3], 1
    %157 = vsyncpa [#allocation6], 1
    %158 = vsyncpa [#allocation4], 1

</llo_original>
